<compile_context>
chip_gen: v5e
topology: v5e:2x2
jax: 0.10.0
libtpu: 0.0.40
codegen_flags: <defaults>
</compile_context>

<pallas_src>
import jax
import jax.numpy as jnp
from jax.experimental import pallas as pl
from jax.experimental.pallas import tpu as pltpu


# ---------------------------------------------------------------------------
# Fused kernel: (Linear -> ReLU -> Dropout(0) -> Linear) + CrossEntropyLoss
# Grid: one program per batch tile.  Weights/biases are VMEM-resident
# (constant index_map -> DMA'd once).  Each tile emits its logits slab plus a
# lane-dense partial CE sum; tiles are fully independent ("parallel").
# ---------------------------------------------------------------------------
def _fused_mlp_ce_kernel(
    x_ref, w1_ref, b1_ref, w2_ref, b2_ref, labels_ref,   # inputs
    logits_ref, loss_part_ref,                           # outputs
):
    # ---- MLP forward (per batch tile) ------------------------------------
    x = x_ref[...]                                           # (tb, D) f32
    # MXU in bf16, accumulate f32; bias add + ReLU in f32.
    h = jnp.dot(x.astype(jnp.bfloat16), w1_ref[...],
                preferred_element_type=jnp.float32) + b1_ref[...]
    h = jnp.maximum(h, 0.0)                                  # ReLU
    # nn.Dropout(p=0.0) (get_mlp default) -> identity
    logits = jnp.dot(h.astype(jnp.bfloat16), w2_ref[...],
                     preferred_element_type=jnp.float32) + b2_ref[...]
    logits_ref[...] = logits                                 # lane-dense (tb, C)

    # ---- Cross-entropy partial sum on shifted logits (all f32) ------------
    m = jnp.max(logits, axis=-1, keepdims=True)              # (tb, 1)  XLU
    z = logits - m                                           # shifted
    lse = jnp.log(jnp.sum(jnp.exp(z), axis=-1, keepdims=True))   # (tb, 1)  EUP+XLU
    col = jax.lax.broadcasted_iota(jnp.int32, z.shape, 1)
    onehot = (col == labels_ref[...]).astype(jnp.float32)    # (tb, C)
    picked_z = jnp.sum(z * onehot, axis=-1, keepdims=True)   # (tb, 1)
    tile_sum = jnp.sum(lse - picked_z)                       # scalar: sum of per-row CE
    # Splat into a lane-dense (1, 8, 128) block; wrapper reads [i, 0, 0].
    loss_part_ref[...] = jnp.full(loss_part_ref.shape, tile_sum, jnp.float32)


def mlp_ce_fused(x, w1, b1, w2, b2, labels, *, batch_tile=1024):
    """Fused Net.get_mlp(D, C) forward + Net.loss (CrossEntropyLoss, mean).

    Weights are fed to the MXU in bf16 (f32 accumulation); logits are f32.
    """
    B, d_in = x.shape
    d_out = w2.shape[1]
    tb = min(B, batch_tile)
    assert B % tb == 0, "batch must divide the batch tile"
    num_tiles = B // tb

    labels2d = labels.reshape(B, 1).astype(jnp.int32)
    w1_bf = w1.astype(jnp.bfloat16)
    w2_bf = w2.astype(jnp.bfloat16)

    logits, loss_parts = pl.pallas_call(
        _fused_mlp_ce_kernel,
        out_shape=(
            jax.ShapeDtypeStruct((B, d_out), jnp.float32),          # logits ("outputs")
            jax.ShapeDtypeStruct((num_tiles, 8, 128), jnp.float32),  # per-tile CE sums
        ),
        grid_spec=pltpu.PrefetchScalarGridSpec(
            num_scalar_prefetch=0,
            grid=(num_tiles,),
            in_specs=[
                pl.BlockSpec((tb, d_in), lambda i: (i, 0)),     # x tile
                pl.BlockSpec((d_in, d_in), lambda i: (0, 0)),   # w1 bf16 (resident)
                pl.BlockSpec((1, d_in), lambda i: (0, 0)),      # b1 f32 (resident)
                pl.BlockSpec((d_in, d_out), lambda i: (0, 0)),  # w2 bf16 (resident)
                pl.BlockSpec((1, d_out), lambda i: (0, 0)),     # b2 f32 (resident)
                pl.BlockSpec((tb, 1), lambda i: (i, 0)),        # labels tile
            ],
            out_specs=[
                pl.BlockSpec((tb, d_out), lambda i: (i, 0)),    # logits tile (lane-dense)
                pl.BlockSpec((1, 8, 128), lambda i: (i, 0, 0)),  # partial CE (lane-dense)
            ],
        ),
        compiler_params=pltpu.CompilerParams(
            # tiles are independent -> megacore sharding on v7x, no-op on v5e/v6e
            dimension_semantics=("parallel",),
        ),
    )(x, w1_bf, b1, w2_bf, b2, labels2d)

    loss = jnp.sum(loss_parts[:, 0, 0]) * (1.0 / B)   # mean over GLOBAL batch
    return logits, loss


# ---------------------------------------------------------------------------
# Deterministic parameter init (xavier-uniform, like nn.Linear default scale)
# ---------------------------------------------------------------------------
def xavier_uniform(key, shape):
    fan_in, fan_out = shape
    bound = (6.0 / (fan_in + fan_out)) ** 0.5
    return jax.random.uniform(key, shape, jnp.float32, -bound, bound)


if __name__ == "__main__":
    # Lane-dense sizes: feature dims are 128-multiples, batch a multiple of 8.
    B, D_IN, N_CLASSES = 256, 128, 128

    key = jax.random.PRNGKey(0)
    kx, kw1, kb1, kw2, kb2, kl = jax.random.split(key, 6)

    x = jax.random.normal(kx, (B, D_IN), jnp.float32)
    w1 = xavier_uniform(kw1, (D_IN, D_IN))
    b1 = jax.random.uniform(kb1, (1, D_IN), jnp.float32, -0.1, 0.1)
    w2 = xavier_uniform(kw2, (D_IN, N_CLASSES))
    b2 = jax.random.uniform(kb2, (1, N_CLASSES), jnp.float32, -0.1, 0.1)
    labels = jax.random.randint(kl, (B,), 0, N_CLASSES, jnp.int32)

    # Pallas: fused MLP forward + cross-entropy (Net.get_mlp + Net.loss)
    outputs, loss = mlp_ce_fused(x, w1, b1, w2, b2, labels)
    jax.block_until_ready(loss)

    # Pure-JAX reference with the SAME bf16-input / f32-accumulate matmuls
    w1_bf = w1.astype(jnp.bfloat16)
    w2_bf = w2.astype(jnp.bfloat16)
    h_ref = jnp.maximum(
        jnp.dot(x.astype(jnp.bfloat16), w1_bf,
                preferred_element_type=jnp.float32) + b1, 0.0)
    out_ref = jnp.dot(h_ref.astype(jnp.bfloat16), w2_bf,
                      preferred_element_type=jnp.float32) + b2
    logp = jax.nn.log_softmax(out_ref, axis=-1)
    loss_ref = -jnp.mean(logp[jnp.arange(B), labels])

    assert jnp.allclose(outputs, out_ref, atol=1e-3, rtol=1e-3), "logits mismatch"
    assert jnp.allclose(loss, loss_ref, atol=1e-3, rtol=1e-3), "loss mismatch"

    print("KERNEL_OK")
</pallas_src>

<mosaic_0001>
module attributes {stable_mosaic.version = 11 : i64} {
  func.func @_fused_mlp_ce_kernel(%arg0: i32, %arg1: memref<256x128xf32, #tpu.memory_space<vmem>>, %arg2: memref<128x128xbf16, #tpu.memory_space<vmem>>, %arg3: memref<1x128xf32, #tpu.memory_space<vmem>>, %arg4: memref<128x128xbf16, #tpu.memory_space<vmem>>, %arg5: memref<1x128xf32, #tpu.memory_space<vmem>>, %arg6: memref<256x1xi32, #tpu.memory_space<vmem>>, %arg7: memref<256x128xf32, #tpu.memory_space<vmem>>, %arg8: memref<1x8x128xf32, #tpu.memory_space<vmem>>) attributes {dimension_semantics = [#tpu.dimension_semantics<parallel>], iteration_bounds = array<i64: 1>, scalar_prefetch = 0 : i64, scratch_operands = 0 : i64, tpu.core_type = #tpu.core_type<tc>, window_params = [{transform_indices = @transform_0, window_bounds = array<i64: 256, 128>}, {pipeline_mode = #tpu.pipeline_mode<synchronous>, transform_indices = @transform_1, window_bounds = array<i64: 128, 128>}, {pipeline_mode = #tpu.pipeline_mode<synchronous>, transform_indices = @transform_2, window_bounds = array<i64: 1, 128>}, {pipeline_mode = #tpu.pipeline_mode<synchronous>, transform_indices = @transform_3, window_bounds = array<i64: 128, 128>}, {pipeline_mode = #tpu.pipeline_mode<synchronous>, transform_indices = @transform_4, window_bounds = array<i64: 1, 128>}, {transform_indices = @transform_5, window_bounds = array<i64: 256, 1>}, {transform_indices = @transform_6, window_bounds = array<i64: 256, 128>}, {transform_indices = @transform_7, window_bounds = array<i64: 1, 8, 128>}]} {
    %c0 = arith.constant 0 : index
    %c0_0 = arith.constant 0 : index
    %0 = vector.load %arg1[%c0, %c0_0] : memref<256x128xf32, #tpu.memory_space<vmem>>, vector<256x128xf32>
    %1 = arith.truncf %0 : vector<256x128xf32> to vector<256x128xbf16>
    %c0_1 = arith.constant 0 : index
    %c0_2 = arith.constant 0 : index
    %2 = vector.load %arg2[%c0_1, %c0_2] : memref<128x128xbf16, #tpu.memory_space<vmem>>, vector<128x128xbf16>
    %cst = arith.constant dense<0.000000e+00> : vector<256x128xf32>
    %3 = tpu.matmul %1, %2, %cst {dimension_numbers = #tpu.dot_dimension_numbers<[1], [0], [0], [1], [0, 0, 1, 1], [], []>} : vector<256x128xbf16>, vector<128x128xbf16>, vector<256x128xf32> -> vector<256x128xf32>
    %c0_3 = arith.constant 0 : index
    %c0_4 = arith.constant 0 : index
    %4 = vector.load %arg3[%c0_3, %c0_4] : memref<1x128xf32, #tpu.memory_space<vmem>>, vector<1x128xf32>
    %5 = vector.broadcast %4 : vector<1x128xf32> to vector<256x128xf32>
    %6 = arith.addf %3, %5 : vector<256x128xf32>
    %cst_5 = arith.constant 0.000000e+00 : f32
    %7 = vector.broadcast %cst_5 : f32 to vector<256x128xf32>
    %8 = arith.maximumf %6, %7 : vector<256x128xf32>
    %9 = arith.truncf %8 : vector<256x128xf32> to vector<256x128xbf16>
    %c0_6 = arith.constant 0 : index
    %c0_7 = arith.constant 0 : index
    %10 = vector.load %arg4[%c0_6, %c0_7] : memref<128x128xbf16, #tpu.memory_space<vmem>>, vector<128x128xbf16>
    %cst_8 = arith.constant dense<0.000000e+00> : vector<256x128xf32>
    %11 = tpu.matmul %9, %10, %cst_8 {dimension_numbers = #tpu.dot_dimension_numbers<[1], [0], [0], [1], [0, 0, 1, 1], [], []>} : vector<256x128xbf16>, vector<128x128xbf16>, vector<256x128xf32> -> vector<256x128xf32>
    %c0_9 = arith.constant 0 : index
    %c0_10 = arith.constant 0 : index
    %12 = vector.load %arg5[%c0_9, %c0_10] : memref<1x128xf32, #tpu.memory_space<vmem>>, vector<1x128xf32>
    %13 = vector.broadcast %12 : vector<1x128xf32> to vector<256x128xf32>
    %14 = arith.addf %11, %13 : vector<256x128xf32>
    %c0_11 = arith.constant 0 : index
    %c0_12 = arith.constant 0 : index
    %15 = vector.load %arg7[%c0_11, %c0_12] : memref<256x128xf32, #tpu.memory_space<vmem>>, vector<256x128xf32>
    tpu.vector_store %arg7[%c0_11, %c0_12], %14 {strides = array<i32>} : memref<256x128xf32, #tpu.memory_space<vmem>>, vector<256x128xf32>,
    %cst_13 = arith.constant dense<0xFF800000> : vector<256xf32>
    %16 = vector.multi_reduction <maximumf>, %14, %cst_13 [1] : vector<256x128xf32> to vector<256xf32>
    %17 = vector.shape_cast %16 : vector<256xf32> to vector<256x1xf32>
    %18 = vector.broadcast %17 : vector<256x1xf32> to vector<256x128xf32>
    %19 = arith.subf %14, %18 : vector<256x128xf32>
    %20 = math.exp %19 : vector<256x128xf32>
    %cst_14 = arith.constant dense<0.000000e+00> : vector<256xf32>
    %21 = vector.multi_reduction <add>, %20, %cst_14 [1] : vector<256x128xf32> to vector<256xf32>
    %22 = vector.shape_cast %21 : vector<256xf32> to vector<256x1xf32>
    %23 = math.log %22 : vector<256x1xf32>
    %24 = tpu.iota {dimensions = array<i32: 1>} : vector<256x128xi32>
    %c0_15 = arith.constant 0 : index
    %c0_16 = arith.constant 0 : index
    %25 = vector.load %arg6[%c0_15, %c0_16] : memref<256x1xi32, #tpu.memory_space<vmem>>, vector<256x1xi32>
    %26 = vector.broadcast %25 : vector<256x1xi32> to vector<256x128xi32>
    %27 = arith.cmpi eq, %24, %26 : vector<256x128xi32>
    %28 = arith.extui %27 : vector<256x128xi1> to vector<256x128xi32>
    %29 = arith.sitofp %28 : vector<256x128xi32> to vector<256x128xf32>
    %30 = arith.mulf %19, %29 : vector<256x128xf32>
    %cst_17 = arith.constant dense<0.000000e+00> : vector<256xf32>
    %31 = vector.multi_reduction <add>, %30, %cst_17 [1] : vector<256x128xf32> to vector<256xf32>
    %32 = vector.shape_cast %31 : vector<256xf32> to vector<256x1xf32>
    %33 = arith.subf %23, %32 : vector<256x1xf32>
    %34 = vector.shape_cast %33 : vector<256x1xf32> to vector<1x256x1xf32>
    %cst_18 = arith.constant dense<0.000000e+00> : vector<1xf32>
    %35 = vector.multi_reduction <add>, %34, %cst_18 [1, 2] : vector<1x256x1xf32> to vector<1xf32>
    %36 = vector.shape_cast %35 : vector<1xf32> to vector<1x1x1xf32>
    %37 = vector.extract %36[0, 0, 0] : f32 from vector<1x1x1xf32>
    %38 = vector.broadcast %37 : f32 to vector<1x8x128xf32>
    %c0_19 = arith.constant 0 : index
    %c0_20 = arith.constant 0 : index
    %c0_21 = arith.constant 0 : index
    %39 = vector.load %arg8[%c0_19, %c0_20, %c0_21] : memref<1x8x128xf32, #tpu.memory_space<vmem>>, vector<1x8x128xf32>
    tpu.vector_store %arg8[%c0_19, %c0_20, %c0_21], %38 {strides = array<i32>} : memref<1x8x128xf32, #tpu.memory_space<vmem>>, vector<1x8x128xf32>,
    return
  }
  func.func @transform_0(%arg0: i32) -> (i32, i32) {
    %c0_i32 = arith.constant 0 : i32
    %c0_i32_0 = arith.constant 0 : i32
    return %arg0, %c0_i32 : i32, i32
  }
  func.func @transform_1(%arg0: i32) -> (i32, i32) {
    %c0_i32 = arith.constant 0 : i32
    %c0_i32_0 = arith.constant 0 : i32
    %c0_i32_1 = arith.constant 0 : i32
    return %c0_i32, %c0_i32_0 : i32, i32
  }
  func.func @transform_2(%arg0: i32) -> (i32, i32) {
    %c0_i32 = arith.constant 0 : i32
    %c0_i32_0 = arith.constant 0 : i32
    %c0_i32_1 = arith.constant 0 : i32
    return %c0_i32, %c0_i32_0 : i32, i32
  }
  func.func @transform_3(%arg0: i32) -> (i32, i32) {
    %c0_i32 = arith.constant 0 : i32
    %c0_i32_0 = arith.constant 0 : i32
    %c0_i32_1 = arith.constant 0 : i32
    return %c0_i32, %c0_i32_0 : i32, i32
  }
  func.func @transform_4(%arg0: i32) -> (i32, i32) {
    %c0_i32 = arith.constant 0 : i32
    %c0_i32_0 = arith.constant 0 : i32
    %c0_i32_1 = arith.constant 0 : i32
    return %c0_i32, %c0_i32_0 : i32, i32
  }
  func.func @transform_5(%arg0: i32) -> (i32, i32) {
    %c0_i32 = arith.constant 0 : i32
    %c0_i32_0 = arith.constant 0 : i32
    return %arg0, %c0_i32 : i32, i32
  }
  func.func @transform_6(%arg0: i32) -> (i32, i32) {
    %c0_i32 = arith.constant 0 : i32
    %c0_i32_0 = arith.constant 0 : i32
    return %arg0, %c0_i32 : i32, i32
  }
  func.func @transform_7(%arg0: i32) -> (i32, i32, i32) {
    %c0_i32 = arith.constant 0 : i32
    %c0_i32_0 = arith.constant 0 : i32
    %c0_i32_1 = arith.constant 0 : i32
    return %arg0, %c0_i32, %c0_i32_0 : i32, i32, i32
  }
}

</mosaic_0001>

<llo_original>
// kernel: tpu_custom_call.1
$region0: #{tpu_custom_call.1}
  #allocation0 [shape = 'u32[]', space=smem, size = 0x4, offset = 0x4, fixed_abs, tag = 'smem constant byte address 0x4 - core index']
  #allocation1 [shape = 'u32[72,128]{1,0:T(1,128)}', space=vmem, size = 0x9000, scoped, tag = 'internal scratch']
  %s0 = inlined_call_operand.vmem [shape: f32[256,128], index: 0, kind: input, shape index: {}]
  %s1 = inlined_call_operand.hbm [shape: bf16[128,128], index: 1, kind: input, shape index: {}]
  %s2 = inlined_call_operand.vmem [shape: f32[1,128], index: 2, kind: input, shape index: {}]
  %s3 = inlined_call_operand.hbm [shape: bf16[128,128], index: 3, kind: input, shape index: {}]
  %s4 = inlined_call_operand.vmem [shape: f32[1,128], index: 4, kind: input, shape index: {}]
  %s5 = inlined_call_operand.vmem [shape: s32[256,1], index: 5, kind: input, shape index: {}]
  %s6 = inlined_call_operand.hbm [shape: f32[256,128], index: 6, kind: output, shape index: {0}]
  %s7 = inlined_call_operand.hbm [shape: f32[1,8,128], index: 7, kind: output, shape index: {1}]
  %8 = xla_tuple %s6, %s7
  %s9 = sld [smem:[#allocation0]]
  $region50: #{tpu_custom_call.1} parent=0
    _
  %s11 = ssub.s32 1, %s9
  %s12 = scalar_select 0, %s11, %s9
  $region1: #{tpu_custom_call.1} parent=0
    #allocation2 [shape = 'u8[32768]{0}', space=vmem, size = 0x8000, scoped, tag = 'input window, operand 1, single buffered']
    #allocation3 [shape = 's32[1]{0}', space=sflag, size = 0x4, scoped, tag = 'scoped memory for tpu_custom_call.1']
    #allocation4 [shape = 's32[1]{0}', space=sflag, size = 0x4, scoped, tag = 'scoped memory for tpu_custom_call.1']
    #allocation5 [shape = 'u8[32768]{0}', space=vmem, size = 0x8000, scoped, tag = 'input window, operand 3, single buffered']
    #allocation6 [shape = 's32[1]{0}', space=sflag, size = 0x4, scoped, tag = 'scoped memory for tpu_custom_call.1']
    #allocation7 [shape = 'u8[131072]{0}', space=vmem, size = 0x20000, scoped, tag = 'output window, operand 0, single buffered']
    #allocation8 [shape = 'u8[4096]{0}', space=vmem, size = 0x1000, scoped, tag = 'output window, operand 1, single buffered']
    #allocation9 [shape = 's32[1]{0}', space=sflag, size = 0x4, scoped, tag = 'scoped memory for tpu_custom_call.1']
    %13 = vsyncpa [#allocation3], 0
    %14 = vsyncpa [#allocation6], 0
    %15 = vsyncpa [#allocation4], 0
    %16 = vsyncpa [#allocation9], 0
    // Predicated region
    $region2: #{tpu_custom_call.1} parent=1 // pred_check
      _
    $region3: #{tpu_custom_call.1} parent=1 // pred_check_branch
      %18 = sbr.rel (0) target = $region5
    $region4: #{tpu_custom_call.1} parent=1 // pred_region
      _
    $region5: #{tpu_custom_call.1} parent=1 // pred_fallthru
      _
    // Predicated region
    $region6: #{tpu_custom_call.1} parent=1 // pred_check
      _
    $region7: #{tpu_custom_call.1} parent=1 // pred_check_branch
      %20 = sbr.rel (0) target = $region9
    $region8: #{tpu_custom_call.1} parent=1 // pred_region
      %22 = vsyncadd [#allocation3], 0
      %s23 = sshll.u32 %s1, 4
      %s24 = int_to_ptr.hbm [resolvable:$true] %s23
      %s25 = sshll.u32 [#allocation2], 4
      %s26 = int_to_ptr.vmem [resolvable:$true] %s25
      %31 = dma.hbm_to_vmem [thread:$0]  %s24, 1024, %s26, [#allocation3], 64, 64, 4
    $region9: #{tpu_custom_call.1} parent=1 // pred_fallthru
      _
    // Predicated region
    $region10: #{tpu_custom_call.1} parent=1 // pred_check
      _
    $region11: #{tpu_custom_call.1} parent=1 // pred_check_branch
      %33 = sbr.rel (0) target = $region13
    $region12: #{tpu_custom_call.1} parent=1 // pred_region
      _
    $region13: #{tpu_custom_call.1} parent=1 // pred_fallthru
      _
    // Predicated region
    $region14: #{tpu_custom_call.1} parent=1 // pred_check
      _
    $region15: #{tpu_custom_call.1} parent=1 // pred_check_branch
      %35 = sbr.rel (0) target = $region17
    $region16: #{tpu_custom_call.1} parent=1 // pred_region
      %37 = vsyncadd [#allocation6], 0
      %s38 = sshll.u32 %s3, 4
      %s39 = int_to_ptr.hbm [resolvable:$true] %s38
      %s40 = sshll.u32 [#allocation5], 4
      %s41 = int_to_ptr.vmem [resolvable:$true] %s40
      %46 = dma.hbm_to_vmem [thread:$0]  %s39, 1024, %s41, [#allocation6], 64, 64, 4
    $region17: #{tpu_custom_call.1} parent=1 // pred_fallthru
      _
    // Predicated region
    $region18: #{tpu_custom_call.1} parent=1 // pred_check
      _
    $region19: #{tpu_custom_call.1} parent=1 // pred_check_branch
      %48 = sbr.rel (0) target = $region21
    $region20: #{tpu_custom_call.1} parent=1 // pred_region
      _
    $region21: #{tpu_custom_call.1} parent=1 // pred_fallthru
      _
    // Predicated region
    $region22: #{tpu_custom_call.1} parent=1 // pred_check
      _
    $region23: #{tpu_custom_call.1} parent=1 // pred_check_branch
      %50 = sbr.rel (0) target = $region25
    $region24: #{tpu_custom_call.1} parent=1 // pred_region
      _
    $region25: #{tpu_custom_call.1} parent=1 // pred_fallthru
      _
    // Predicated region
    $region26: #{tpu_custom_call.1} parent=1 // pred_check
      _
    $region27: #{tpu_custom_call.1} parent=1 // pred_check_branch
      %52 = sbr.rel (0) target = $region29
    $region28: #{tpu_custom_call.1} parent=1 // pred_region
      %54 = dma.done [#allocation3], 1024
    $region29: #{tpu_custom_call.1} parent=1 // pred_fallthru
      _
    // Predicated region
    $region30: #{tpu_custom_call.1} parent=1 // pred_check
      _
    $region31: #{tpu_custom_call.1} parent=1 // pred_check_branch
      %56 = sbr.rel (0) target = $region33
    $region32: #{tpu_custom_call.1} parent=1 // pred_region
      %58 = dma.done [#allocation6], 1024
    $region33: #{tpu_custom_call.1} parent=1 // pred_fallthru
      _
    %v59 = vld [vmem:[%s0] sm:$0xff]
    %v60 = vld [vmem:[%s0 + $0x8] sm:$0xff]
    %v61 = vld [vmem:[%s0 + $0x10] sm:$0xff]
    %v62 = vld [vmem:[%s0 + $0x18] sm:$0xff]
    %v63 = vld [vmem:[%s0 + $0x20] sm:$0xff]
    %v64 = vld [vmem:[%s0 + $0x28] sm:$0xff]
    %v65 = vld [vmem:[%s0 + $0x30] sm:$0xff]
    %v66 = vld [vmem:[%s0 + $0x38] sm:$0xff]
    %v67 = vld [vmem:[%s0 + $0x40] sm:$0xff]
    %v68 = vld [vmem:[%s0 + $0x48] sm:$0xff]
    %v69 = vld [vmem:[%s0 + $0x50] sm:$0xff]
    %v70 = vld [vmem:[%s0 + $0x58] sm:$0xff]
    %v71 = vld [vmem:[%s0 + $0x60] sm:$0xff]
    %v72 = vld [vmem:[%s0 + $0x68] sm:$0xff]
    %v73 = vld [vmem:[%s0 + $0x70] sm:$0xff]
    %v74 = vld [vmem:[%s0 + $0x78] sm:$0xff]
    %v75 = vld [vmem:[%s0 + $0x80] sm:$0xff]
    %v76 = vld [vmem:[%s0 + $0x88] sm:$0xff]
    %v77 = vld [vmem:[%s0 + $0x90] sm:$0xff]
    %v78 = vld [vmem:[%s0 + $0x98] sm:$0xff]
    %v79 = vld [vmem:[%s0 + $0xa0] sm:$0xff]
    %v80 = vld [vmem:[%s0 + $0xa8] sm:$0xff]
    %v81 = vld [vmem:[%s0 + $0xb0] sm:$0xff]
    %v82 = vld [vmem:[%s0 + $0xb8] sm:$0xff]
    %v83 = vld [vmem:[%s0 + $0xc0] sm:$0xff]
    %v84 = vld [vmem:[%s0 + $0xc8] sm:$0xff]
    %v85 = vld [vmem:[%s0 + $0xd0] sm:$0xff]
    %v86 = vld [vmem:[%s0 + $0xd8] sm:$0xff]
    %v87 = vld [vmem:[%s0 + $0xe0] sm:$0xff]
    %v88 = vld [vmem:[%s0 + $0xe8] sm:$0xff]
    %v89 = vld [vmem:[%s0 + $0xf0] sm:$0xff]
    %v90 = vld [vmem:[%s0 + $0xf8] sm:$0xff]
    %v91 = vpack.c.bf16 %v60, %v59
    %v92 = vpack.c.bf16 %v62, %v61
    %v93 = vpack.c.bf16 %v64, %v63
    %v94 = vpack.c.bf16 %v66, %v65
    %v95 = vpack.c.bf16 %v68, %v67
    %v96 = vpack.c.bf16 %v70, %v69
    %v97 = vpack.c.bf16 %v72, %v71
    %v98 = vpack.c.bf16 %v74, %v73
    %v99 = vpack.c.bf16 %v76, %v75
    %v100 = vpack.c.bf16 %v78, %v77
    %v101 = vpack.c.bf16 %v80, %v79
    %v102 = vpack.c.bf16 %v82, %v81
    %v103 = vpack.c.bf16 %v84, %v83
    %v104 = vpack.c.bf16 %v86, %v85
    %v105 = vpack.c.bf16 %v88, %v87
    %v106 = vpack.c.bf16 %v90, %v89
    %v107 = vld [vmem:[#allocation2] sm:$0xf]
    %v108 = vld [vmem:[#allocation2 + $0x4] sm:$0xf]
    %v109 = vld [vmem:[#allocation2 + $0x8] sm:$0xf]
    %v110 = vld [vmem:[#allocation2 + $0xc] sm:$0xf]
    %v111 = vld [vmem:[#allocation2 + $0x10] sm:$0xf]
    %v112 = vld [vmem:[#allocation2 + $0x14] sm:$0xf]
    %v113 = vld [vmem:[#allocation2 + $0x18] sm:$0xf]
    %v114 = vld [vmem:[#allocation2 + $0x1c] sm:$0xf]
    %v115 = vld [vmem:[#allocation2 + $0x20] sm:$0xf]
    %v116 = vld [vmem:[#allocation2 + $0x24] sm:$0xf]
    %v117 = vld [vmem:[#allocation2 + $0x28] sm:$0xf]
    %v118 = vld [vmem:[#allocation2 + $0x2c] sm:$0xf]
    %v119 = vld [vmem:[#allocation2 + $0x30] sm:$0xf]
    %v120 = vld [vmem:[#allocation2 + $0x34] sm:$0xf]
    %v121 = vld [vmem:[#allocation2 + $0x38] sm:$0xf]
    %v122 = vld [vmem:[#allocation2 + $0x3c] sm:$0xf]
    %v123 = vld [vmem:[%s2] sm:$0x1]
    %v125 = vperm.slane %v123, 0
    %v143 = vunpack.c.l.b16 %v107
    %v144 = vunpack.c.l.b16 %v108
    %v145 = vunpack.c.l.b16 %v109
    %v146 = vunpack.c.l.b16 %v110
    %v147 = vunpack.c.l.b16 %v111
    %v148 = vunpack.c.l.b16 %v112
    %v149 = vunpack.c.l.b16 %v113
    %v150 = vunpack.c.l.b16 %v114
    %v151 = vunpack.c.l.b16 %v115
    %v152 = vunpack.c.l.b16 %v116
    %v153 = vunpack.c.l.b16 %v117
    %v154 = vunpack.c.l.b16 %v118
    %v155 = vunpack.c.l.b16 %v119
    %v156 = vunpack.c.l.b16 %v120
    %v157 = vunpack.c.l.b16 %v121
    %v158 = vunpack.c.l.b16 %v122
    %v159 = vpack.c.b16 %v144, %v143
    %v160 = vpack.c.b16 %v146, %v145
    %v161 = vpack.c.b16 %v148, %v147
    %v162 = vpack.c.b16 %v150, %v149
    %v163 = vpack.c.b16 %v152, %v151
    %v164 = vpack.c.b16 %v154, %v153
    %v165 = vpack.c.b16 %v156, %v155
    %v166 = vpack.c.b16 %v158, %v157
    %175 = vmatpush.bf16.msra.mxu0 %v166
    %176 = vmatpush.bf16.msra.mxu0 %v165
    %177 = vmatpush.bf16.msra.mxu0 %v164
    %178 = vmatpush.bf16.msra.mxu0 %v163
    %179 = vmatpush.bf16.msra.mxu0 %v162
    %180 = vmatpush.bf16.msra.mxu0 %v161
    %181 = vmatpush.bf16.msra.mxu0 %v160
    %182 = vmatpush.bf16.msra.mxu0 %v159
    %183 = vmatmul.bf16.gmra.mxu0 %v91
    %v184 = vpop.f32.mrf.mxu0
    %v185 = vadd.f32 %v125, %v184
    %v186 = vpop.f32.mrf.mxu0
    %v187 = vadd.f32 %v125, %v186
    %188 = vmatmul.bf16.gmra.mxu0 %v92
    %v189 = vpop.f32.mrf.mxu0
    %v190 = vadd.f32 %v125, %v189
    %v191 = vpop.f32.mrf.mxu0
    %v192 = vadd.f32 %v125, %v191
    %193 = vmatmul.bf16.gmra.mxu0 %v93
    %v194 = vpop.f32.mrf.mxu0
    %v195 = vadd.f32 %v125, %v194
    %v196 = vpop.f32.mrf.mxu0
    %v197 = vadd.f32 %v125, %v196
    %198 = vmatmul.bf16.gmra.mxu0 %v94
    %v199 = vpop.f32.mrf.mxu0
    %v200 = vadd.f32 %v125, %v199
    %v201 = vpop.f32.mrf.mxu0
    %v202 = vadd.f32 %v125, %v201
    %203 = vmatmul.bf16.gmra.mxu0 %v95
    %v204 = vpop.f32.mrf.mxu0
    %v205 = vadd.f32 %v125, %v204
    %v206 = vpop.f32.mrf.mxu0
    %v207 = vadd.f32 %v125, %v206
    %208 = vmatmul.bf16.gmra.mxu0 %v96
    %v209 = vpop.f32.mrf.mxu0
    %v210 = vadd.f32 %v125, %v209
    %v211 = vpop.f32.mrf.mxu0
    %v212 = vadd.f32 %v125, %v211
    %213 = vmatmul.bf16.gmra.mxu0 %v97
    %v214 = vpop.f32.mrf.mxu0
    %v215 = vadd.f32 %v125, %v214
    %v216 = vpop.f32.mrf.mxu0
    %v217 = vadd.f32 %v125, %v216
    %218 = vmatmul.bf16.gmra.mxu0 %v98
    %v219 = vpop.f32.mrf.mxu0
    %v220 = vadd.f32 %v125, %v219
    %v221 = vpop.f32.mrf.mxu0
    %v222 = vadd.f32 %v125, %v221
    %223 = vmatmul.bf16.gmra.mxu0 %v99
    %v224 = vpop.f32.mrf.mxu0
    %v225 = vadd.f32 %v125, %v224
    %v226 = vpop.f32.mrf.mxu0
    %v227 = vadd.f32 %v125, %v226
    %228 = vmatmul.bf16.gmra.mxu0 %v100
    %v229 = vpop.f32.mrf.mxu0
    %v230 = vadd.f32 %v125, %v229
    %v231 = vpop.f32.mrf.mxu0
    %v232 = vadd.f32 %v125, %v231
    %233 = vmatmul.bf16.gmra.mxu0 %v101
    %v234 = vpop.f32.mrf.mxu0
    %v235 = vadd.f32 %v125, %v234
    %v236 = vpop.f32.mrf.mxu0
    %v237 = vadd.f32 %v125, %v236
    %238 = vmatmul.bf16.gmra.mxu0 %v102
    %v239 = vpop.f32.mrf.mxu0
    %v240 = vadd.f32 %v125, %v239
    %v241 = vpop.f32.mrf.mxu0
    %v242 = vadd.f32 %v125, %v241
    %243 = vmatmul.bf16.gmra.mxu0 %v103
    %v244 = vpop.f32.mrf.mxu0
    %v245 = vadd.f32 %v125, %v244
    %v246 = vpop.f32.mrf.mxu0
    %v247 = vadd.f32 %v125, %v246
    %248 = vmatmul.bf16.gmra.mxu0 %v104
    %v249 = vpop.f32.mrf.mxu0
    %v250 = vadd.f32 %v125, %v249
    %v251 = vpop.f32.mrf.mxu0
    %v252 = vadd.f32 %v125, %v251
    %253 = vmatmul.bf16.gmra.mxu0 %v105
    %v254 = vpop.f32.mrf.mxu0
    %v255 = vadd.f32 %v125, %v254
    %v256 = vpop.f32.mrf.mxu0
    %v257 = vadd.f32 %v125, %v256
    %258 = vmatmul.bf16.gmra.mxu0 %v106
    %v259 = vpop.f32.mrf.mxu0
    %v260 = vadd.f32 %v125, %v259
    %v261 = vpop.f32.mrf.mxu0
    %v262 = vadd.f32 %v125, %v261
    %263 = vdwg.mxu0
    %v264 = vmax.f32 %v185, 0.0
    %v265 = vmax.f32 %v187, 0.0
    %v266 = vmax.f32 %v190, 0.0
    %v267 = vmax.f32 %v192, 0.0
    %v268 = vmax.f32 %v195, 0.0
    %v269 = vmax.f32 %v197, 0.0
    %v270 = vmax.f32 %v200, 0.0
    %v271 = vmax.f32 %v202, 0.0
    %v272 = vmax.f32 %v205, 0.0
    %v273 = vmax.f32 %v207, 0.0
    %v274 = vmax.f32 %v210, 0.0
    %v275 = vmax.f32 %v212, 0.0
    %v276 = vmax.f32 %v215, 0.0
    %v277 = vmax.f32 %v217, 0.0
    %v278 = vmax.f32 %v220, 0.0
    %v279 = vmax.f32 %v222, 0.0
    %v280 = vmax.f32 %v225, 0.0
    %v281 = vmax.f32 %v227, 0.0
    %v282 = vmax.f32 %v230, 0.0
    %v283 = vmax.f32 %v232, 0.0
    %v284 = vmax.f32 %v235, 0.0
    %v285 = vmax.f32 %v237, 0.0
    %v286 = vmax.f32 %v240, 0.0
    %v287 = vmax.f32 %v242, 0.0
    %v288 = vmax.f32 %v245, 0.0
    %v289 = vmax.f32 %v247, 0.0
    %v290 = vmax.f32 %v250, 0.0
    %v291 = vmax.f32 %v252, 0.0
    %v292 = vmax.f32 %v255, 0.0
    %v293 = vmax.f32 %v257, 0.0
    %v294 = vmax.f32 %v260, 0.0
    %v295 = vmax.f32 %v262, 0.0
    %v296 = vpack.c.bf16 %v265, %v264
    %v297 = vpack.c.bf16 %v267, %v266
    %v298 = vpack.c.bf16 %v269, %v268
    %v299 = vpack.c.bf16 %v271, %v270
    %v300 = vpack.c.bf16 %v273, %v272
    %v301 = vpack.c.bf16 %v275, %v274
    %v302 = vpack.c.bf16 %v277, %v276
    %v303 = vpack.c.bf16 %v279, %v278
    %v304 = vpack.c.bf16 %v281, %v280
    %v305 = vpack.c.bf16 %v283, %v282
    %v306 = vpack.c.bf16 %v285, %v284
    %v307 = vpack.c.bf16 %v287, %v286
    %v308 = vpack.c.bf16 %v289, %v288
    %v309 = vpack.c.bf16 %v291, %v290
    %v310 = vpack.c.bf16 %v293, %v292
    %v311 = vpack.c.bf16 %v295, %v294
    %v312 = vld [vmem:[#allocation5] sm:$0xf]
    %v313 = vld [vmem:[#allocation5 + $0x4] sm:$0xf]
    %v314 = vld [vmem:[#allocation5 + $0x8] sm:$0xf]
    %v315 = vld [vmem:[#allocation5 + $0xc] sm:$0xf]
    %v316 = vld [vmem:[#allocation5 + $0x10] sm:$0xf]
    %v317 = vld [vmem:[#allocation5 + $0x14] sm:$0xf]
    %v318 = vld [vmem:[#allocation5 + $0x18] sm:$0xf]
    %v319 = vld [vmem:[#allocation5 + $0x1c] sm:$0xf]
    %v320 = vld [vmem:[#allocation5 + $0x20] sm:$0xf]
    %v321 = vld [vmem:[#allocation5 + $0x24] sm:$0xf]
    %v322 = vld [vmem:[#allocation5 + $0x28] sm:$0xf]
    %v323 = vld [vmem:[#allocation5 + $0x2c] sm:$0xf]
    %v324 = vld [vmem:[#allocation5 + $0x30] sm:$0xf]
    %v325 = vld [vmem:[#allocation5 + $0x34] sm:$0xf]
    %v326 = vld [vmem:[#allocation5 + $0x38] sm:$0xf]
    %v327 = vld [vmem:[#allocation5 + $0x3c] sm:$0xf]
    %v328 = vld [vmem:[%s4] sm:$0x1]
    %v330 = vperm.slane %v328, 0
    %v348 = vunpack.c.l.b16 %v312
    %v349 = vunpack.c.l.b16 %v313
    %v350 = vunpack.c.l.b16 %v314
    %v351 = vunpack.c.l.b16 %v315
    %v352 = vunpack.c.l.b16 %v316
    %v353 = vunpack.c.l.b16 %v317
    %v354 = vunpack.c.l.b16 %v318
    %v355 = vunpack.c.l.b16 %v319
    %v356 = vunpack.c.l.b16 %v320
    %v357 = vunpack.c.l.b16 %v321
    %v358 = vunpack.c.l.b16 %v322
    %v359 = vunpack.c.l.b16 %v323
    %v360 = vunpack.c.l.b16 %v324
    %v361 = vunpack.c.l.b16 %v325
    %v362 = vunpack.c.l.b16 %v326
    %v363 = vunpack.c.l.b16 %v327
    %v364 = vpack.c.b16 %v349, %v348
    %v365 = vpack.c.b16 %v351, %v350
    %v366 = vpack.c.b16 %v353, %v352
    %v367 = vpack.c.b16 %v355, %v354
    %v368 = vpack.c.b16 %v357, %v356
    %v369 = vpack.c.b16 %v359, %v358
    %v370 = vpack.c.b16 %v361, %v360
    %v371 = vpack.c.b16 %v363, %v362
    %380 = vmatpush.bf16.msra.mxu0 %v371
    %381 = vmatpush.bf16.msra.mxu0 %v370
    %382 = vmatpush.bf16.msra.mxu0 %v369
    %383 = vmatpush.bf16.msra.mxu0 %v368
    %384 = vmatpush.bf16.msra.mxu0 %v367
    %385 = vmatpush.bf16.msra.mxu0 %v366
    %386 = vmatpush.bf16.msra.mxu0 %v365
    %387 = vmatpush.bf16.msra.mxu0 %v364
    %388 = vmatmul.bf16.gmra.mxu0 %v296
    %v389 = vpop.f32.mrf.mxu0
    %v390 = vadd.f32 %v330, %v389
    %v391 = vpop.f32.mrf.mxu0
    %v392 = vadd.f32 %v330, %v391
    %393 = vmatmul.bf16.gmra.mxu0 %v297
    %v394 = vpop.f32.mrf.mxu0
    %v395 = vadd.f32 %v330, %v394
    %v396 = vpop.f32.mrf.mxu0
    %v397 = vadd.f32 %v330, %v396
    %398 = vmatmul.bf16.gmra.mxu0 %v298
    %v399 = vpop.f32.mrf.mxu0
    %v400 = vadd.f32 %v330, %v399
    %v401 = vpop.f32.mrf.mxu0
    %v402 = vadd.f32 %v330, %v401
    %403 = vmatmul.bf16.gmra.mxu0 %v299
    %v404 = vpop.f32.mrf.mxu0
    %v405 = vadd.f32 %v330, %v404
    %v406 = vpop.f32.mrf.mxu0
    %v407 = vadd.f32 %v330, %v406
    %408 = vmatmul.bf16.gmra.mxu0 %v300
    %v409 = vpop.f32.mrf.mxu0
    %v410 = vadd.f32 %v330, %v409
    %v411 = vpop.f32.mrf.mxu0
    %v412 = vadd.f32 %v330, %v411
    %413 = vmatmul.bf16.gmra.mxu0 %v301
    %v414 = vpop.f32.mrf.mxu0
    %v415 = vadd.f32 %v330, %v414
    %v416 = vpop.f32.mrf.mxu0
    %v417 = vadd.f32 %v330, %v416
    %418 = vmatmul.bf16.gmra.mxu0 %v302
    %v419 = vpop.f32.mrf.mxu0
    %v420 = vadd.f32 %v330, %v419
    %v421 = vpop.f32.mrf.mxu0
    %v422 = vadd.f32 %v330, %v421
    %423 = vmatmul.bf16.gmra.mxu0 %v303
    %v424 = vpop.f32.mrf.mxu0
    %v425 = vadd.f32 %v330, %v424
    %v426 = vpop.f32.mrf.mxu0
    %v427 = vadd.f32 %v330, %v426
    %428 = vmatmul.bf16.gmra.mxu0 %v304
    %v429 = vpop.f32.mrf.mxu0
    %v430 = vadd.f32 %v330, %v429
    %v431 = vpop.f32.mrf.mxu0
    %v432 = vadd.f32 %v330, %v431
    %433 = vmatmul.bf16.gmra.mxu0 %v305
    %v434 = vpop.f32.mrf.mxu0
    %v435 = vadd.f32 %v330, %v434
    %v436 = vpop.f32.mrf.mxu0
    %v437 = vadd.f32 %v330, %v436
    %438 = vmatmul.bf16.gmra.mxu0 %v306
    %v439 = vpop.f32.mrf.mxu0
    %v440 = vadd.f32 %v330, %v439
    %v441 = vpop.f32.mrf.mxu0
    %v442 = vadd.f32 %v330, %v441
    %443 = vmatmul.bf16.gmra.mxu0 %v307
    %v444 = vpop.f32.mrf.mxu0
    %v445 = vadd.f32 %v330, %v444
    %v446 = vpop.f32.mrf.mxu0
    %v447 = vadd.f32 %v330, %v446
    %448 = vmatmul.bf16.gmra.mxu0 %v308
    %v449 = vpop.f32.mrf.mxu0
    %v450 = vadd.f32 %v330, %v449
    %v451 = vpop.f32.mrf.mxu0
    %v452 = vadd.f32 %v330, %v451
    %453 = vmatmul.bf16.gmra.mxu0 %v309
    %v454 = vpop.f32.mrf.mxu0
    %v455 = vadd.f32 %v330, %v454
    %v456 = vpop.f32.mrf.mxu0
    %v457 = vadd.f32 %v330, %v456
    %458 = vmatmul.bf16.gmra.mxu0 %v310
    %v459 = vpop.f32.mrf.mxu0
    %v460 = vadd.f32 %v330, %v459
    %v461 = vpop.f32.mrf.mxu0
    %v462 = vadd.f32 %v330, %v461
    %463 = vmatmul.bf16.gmra.mxu0 %v311
    %v464 = vpop.f32.mrf.mxu0
    %v465 = vadd.f32 %v330, %v464
    %v466 = vpop.f32.mrf.mxu0
    %v467 = vadd.f32 %v330, %v466
    %468 = vdwg.mxu0
    %469 = vst [vmem:[#allocation7] sm:$0xff] %v390
    %470 = vst [vmem:[#allocation7 + $0x8] sm:$0xff] %v392
    %471 = vst [vmem:[#allocation7 + $0x10] sm:$0xff] %v395
    %472 = vst [vmem:[#allocation7 + $0x18] sm:$0xff] %v397
    %473 = vst [vmem:[#allocation7 + $0x20] sm:$0xff] %v400
    %474 = vst [vmem:[#allocation7 + $0x28] sm:$0xff] %v402
    %475 = vst [vmem:[#allocation7 + $0x30] sm:$0xff] %v405
    %476 = vst [vmem:[#allocation7 + $0x38] sm:$0xff] %v407
    %477 = vst [vmem:[#allocation7 + $0x40] sm:$0xff] %v410
    %478 = vst [vmem:[#allocation7 + $0x48] sm:$0xff] %v412
    %479 = vst [vmem:[#allocation7 + $0x50] sm:$0xff] %v415
    %480 = vst [vmem:[#allocation7 + $0x58] sm:$0xff] %v417
    %481 = vst [vmem:[#allocation7 + $0x60] sm:$0xff] %v420
    %482 = vst [vmem:[#allocation7 + $0x68] sm:$0xff] %v422
    %483 = vst [vmem:[#allocation7 + $0x70] sm:$0xff] %v425
    %484 = vst [vmem:[#allocation7 + $0x78] sm:$0xff] %v427
    %485 = vst [vmem:[#allocation7 + $0x80] sm:$0xff] %v430
    %486 = vst [vmem:[#allocation7 + $0x88] sm:$0xff] %v432
    %487 = vst [vmem:[#allocation7 + $0x90] sm:$0xff] %v435
    %488 = vst [vmem:[#allocation7 + $0x98] sm:$0xff] %v437
    %489 = vst [vmem:[#allocation7 + $0xa0] sm:$0xff] %v440
    %490 = vst [vmem:[#allocation7 + $0xa8] sm:$0xff] %v442
    %491 = vst [vmem:[#allocation7 + $0xb0] sm:$0xff] %v445
    %492 = vst [vmem:[#allocation7 + $0xb8] sm:$0xff] %v447
    %493 = vst [vmem:[#allocation7 + $0xc0] sm:$0xff] %v450
    %494 = vst [vmem:[#allocation7 + $0xc8] sm:$0xff] %v452
    %495 = vst [vmem:[#allocation7 + $0xd0] sm:$0xff] %v455
    %496 = vst [vmem:[#allocation7 + $0xd8] sm:$0xff] %v457
    %497 = vst [vmem:[#allocation7 + $0xe0] sm:$0xff] %v460
    %498 = vst [vmem:[#allocation7 + $0xe8] sm:$0xff] %v462
    %499 = vst [vmem:[#allocation7 + $0xf0] sm:$0xff] %v465
    %500 = vst [vmem:[#allocation7 + $0xf8] sm:$0xff] %v467
    %501 = vmax.xlane.f32.xlu0 %v390
    %v502 = vpop.xlane.xlu0 %501
    %503 = vmax.xlane.f32.xlu0 %v392
    %v504 = vpop.xlane.xlu0 %503
    %505 = vmax.xlane.f32.xlu0 %v395
    %v506 = vpop.xlane.xlu0 %505
    %507 = vmax.xlane.f32.xlu0 %v397
    %v508 = vpop.xlane.xlu0 %507
    %509 = vmax.xlane.f32.xlu0 %v400
    %v510 = vpop.xlane.xlu0 %509
    %511 = vmax.xlane.f32.xlu0 %v402
    %v512 = vpop.xlane.xlu0 %511
    %513 = vmax.xlane.f32.xlu0 %v405
    %v514 = vpop.xlane.xlu0 %513
    %515 = vmax.xlane.f32.xlu0 %v407
    %v516 = vpop.xlane.xlu0 %515
    %517 = vmax.xlane.f32.xlu0 %v410
    %v518 = vpop.xlane.xlu0 %517
    %519 = vmax.xlane.f32.xlu0 %v412
    %v520 = vpop.xlane.xlu0 %519
    %521 = vmax.xlane.f32.xlu0 %v415
    %v522 = vpop.xlane.xlu0 %521
    %523 = vmax.xlane.f32.xlu0 %v417
    %v524 = vpop.xlane.xlu0 %523
    %525 = vmax.xlane.f32.xlu0 %v420
    %v526 = vpop.xlane.xlu0 %525
    %527 = vmax.xlane.f32.xlu0 %v422
    %v528 = vpop.xlane.xlu0 %527
    %529 = vmax.xlane.f32.xlu0 %v425
    %v530 = vpop.xlane.xlu0 %529
    %531 = vmax.xlane.f32.xlu0 %v427
    %v532 = vpop.xlane.xlu0 %531
    %533 = vmax.xlane.f32.xlu0 %v430
    %v534 = vpop.xlane.xlu0 %533
    %535 = vmax.xlane.f32.xlu0 %v432
    %v536 = vpop.xlane.xlu0 %535
    %537 = vmax.xlane.f32.xlu0 %v435
    %v538 = vpop.xlane.xlu0 %537
    %539 = vmax.xlane.f32.xlu0 %v437
    %v540 = vpop.xlane.xlu0 %539
    %541 = vmax.xlane.f32.xlu0 %v440
    %v542 = vpop.xlane.xlu0 %541
    %543 = vmax.xlane.f32.xlu0 %v442
    %v544 = vpop.xlane.xlu0 %543
    %545 = vmax.xlane.f32.xlu0 %v445
    %v546 = vpop.xlane.xlu0 %545
    %547 = vmax.xlane.f32.xlu0 %v447
    %v548 = vpop.xlane.xlu0 %547
    %549 = vmax.xlane.f32.xlu0 %v450
    %v550 = vpop.xlane.xlu0 %549
    %551 = vmax.xlane.f32.xlu0 %v452
    %v552 = vpop.xlane.xlu0 %551
    %553 = vmax.xlane.f32.xlu0 %v455
    %v554 = vpop.xlane.xlu0 %553
    %555 = vmax.xlane.f32.xlu0 %v457
    %v556 = vpop.xlane.xlu0 %555
    %557 = vmax.xlane.f32.xlu0 %v460
    %v558 = vpop.xlane.xlu0 %557
    %559 = vmax.xlane.f32.xlu0 %v462
    %v560 = vpop.xlane.xlu0 %559
    %561 = vmax.xlane.f32.xlu0 %v465
    %v562 = vpop.xlane.xlu0 %561
    %563 = vmax.xlane.f32.xlu0 %v467
    %v564 = vpop.xlane.xlu0 %563
    %v565 = vsub.f32 %v390, %v502
    %v566 = vsub.f32 %v392, %v504
    %v567 = vsub.f32 %v395, %v506
    %v568 = vsub.f32 %v397, %v508
    %v569 = vsub.f32 %v400, %v510
    %v570 = vsub.f32 %v402, %v512
    %v571 = vsub.f32 %v405, %v514
    %v572 = vsub.f32 %v407, %v516
    %v573 = vsub.f32 %v410, %v518
    %v574 = vsub.f32 %v412, %v520
    %v575 = vsub.f32 %v415, %v522
    %v576 = vsub.f32 %v417, %v524
    %v577 = vsub.f32 %v420, %v526
    %v578 = vsub.f32 %v422, %v528
    %v579 = vsub.f32 %v425, %v530
    %v580 = vsub.f32 %v427, %v532
    %v581 = vsub.f32 %v430, %v534
    %v582 = vsub.f32 %v432, %v536
    %v583 = vsub.f32 %v435, %v538
    %v584 = vsub.f32 %v437, %v540
    %v585 = vsub.f32 %v440, %v542
    %v586 = vsub.f32 %v442, %v544
    %v587 = vsub.f32 %v445, %v546
    %v588 = vsub.f32 %v447, %v548
    %v589 = vsub.f32 %v450, %v550
    %v590 = vsub.f32 %v452, %v552
    %v591 = vsub.f32 %v455, %v554
    %v592 = vsub.f32 %v457, %v556
    %v593 = vsub.f32 %v460, %v558
    %v594 = vsub.f32 %v462, %v560
    %v595 = vsub.f32 %v465, %v562
    %v596 = vsub.f32 %v467, %v564
    %v597 = vmul.f32 %v565, 1.442695
    %v598 = vpow.pop %v597
    %v599 = vmul.f32 %v566, 1.442695
    %v600 = vpow.pop %v599
    %v601 = vmul.f32 %v567, 1.442695
    %v602 = vpow.pop %v601
    %v603 = vmul.f32 %v568, 1.442695
    %v604 = vpow.pop %v603
    %v605 = vmul.f32 %v569, 1.442695
    %v606 = vpow.pop %v605
    %v607 = vmul.f32 %v570, 1.442695
    %v608 = vpow.pop %v607
    %v609 = vmul.f32 %v571, 1.442695
    %v610 = vpow.pop %v609
    %v611 = vmul.f32 %v572, 1.442695
    %v612 = vpow.pop %v611
    %v613 = vmul.f32 %v573, 1.442695
    %v614 = vpow.pop %v613
    %v615 = vmul.f32 %v574, 1.442695
    %v616 = vpow.pop %v615
    %v617 = vmul.f32 %v575, 1.442695
    %v618 = vpow.pop %v617
    %v619 = vmul.f32 %v576, 1.442695
    %v620 = vpow.pop %v619
    %v621 = vmul.f32 %v577, 1.442695
    %v622 = vpow.pop %v621
    %v623 = vmul.f32 %v578, 1.442695
    %v624 = vpow.pop %v623
    %v625 = vmul.f32 %v579, 1.442695
    %v626 = vpow.pop %v625
    %v627 = vmul.f32 %v580, 1.442695
    %v628 = vpow.pop %v627
    %v629 = vmul.f32 %v581, 1.442695
    %v630 = vpow.pop %v629
    %v631 = vmul.f32 %v582, 1.442695
    %v632 = vpow.pop %v631
    %v633 = vmul.f32 %v583, 1.442695
    %v634 = vpow.pop %v633
    %v635 = vmul.f32 %v584, 1.442695
    %v636 = vpow.pop %v635
    %v637 = vmul.f32 %v585, 1.442695
    %v638 = vpow.pop %v637
    %v639 = vmul.f32 %v586, 1.442695
    %v640 = vpow.pop %v639
    %v641 = vmul.f32 %v587, 1.442695
    %v642 = vpow.pop %v641
    %v643 = vmul.f32 %v588, 1.442695
    %v644 = vpow.pop %v643
    %v645 = vmul.f32 %v589, 1.442695
    %v646 = vpow.pop %v645
    %v647 = vmul.f32 %v590, 1.442695
    %v648 = vpow.pop %v647
    %v649 = vmul.f32 %v591, 1.442695
    %v650 = vpow.pop %v649
    %v651 = vmul.f32 %v592, 1.442695
    %v652 = vpow.pop %v651
    %v653 = vmul.f32 %v593, 1.442695
    %v654 = vpow.pop %v653
    %v655 = vmul.f32 %v594, 1.442695
    %v656 = vpow.pop %v655
    %v657 = vmul.f32 %v595, 1.442695
    %v658 = vpow.pop %v657
    %v659 = vmul.f32 %v596, 1.442695
    %v660 = vpow.pop %v659
    %661 = vadd.xlane.f32.xlu0 %v598
    %v662 = vpop.xlane.xlu0 %661
    %663 = vadd.xlane.f32.xlu0 %v600
    %v664 = vpop.xlane.xlu0 %663
    %665 = vadd.xlane.f32.xlu0 %v602
    %v666 = vpop.xlane.xlu0 %665
    %667 = vadd.xlane.f32.xlu0 %v604
    %v668 = vpop.xlane.xlu0 %667
    %669 = vadd.xlane.f32.xlu0 %v606
    %v670 = vpop.xlane.xlu0 %669
    %671 = vadd.xlane.f32.xlu0 %v608
    %v672 = vpop.xlane.xlu0 %671
    %673 = vadd.xlane.f32.xlu0 %v610
    %v674 = vpop.xlane.xlu0 %673
    %675 = vadd.xlane.f32.xlu0 %v612
    %v676 = vpop.xlane.xlu0 %675
    %677 = vadd.xlane.f32.xlu0 %v614
    %v678 = vpop.xlane.xlu0 %677
    %679 = vadd.xlane.f32.xlu0 %v616
    %v680 = vpop.xlane.xlu0 %679
    %681 = vadd.xlane.f32.xlu0 %v618
    %v682 = vpop.xlane.xlu0 %681
    %683 = vadd.xlane.f32.xlu0 %v620
    %v684 = vpop.xlane.xlu0 %683
    %685 = vadd.xlane.f32.xlu0 %v622
    %v686 = vpop.xlane.xlu0 %685
    %687 = vadd.xlane.f32.xlu0 %v624
    %v688 = vpop.xlane.xlu0 %687
    %689 = vadd.xlane.f32.xlu0 %v626
    %v690 = vpop.xlane.xlu0 %689
    %691 = vadd.xlane.f32.xlu0 %v628
    %v692 = vpop.xlane.xlu0 %691
    %693 = vadd.xlane.f32.xlu0 %v630
    %v694 = vpop.xlane.xlu0 %693
    %695 = vadd.xlane.f32.xlu0 %v632
    %v696 = vpop.xlane.xlu0 %695
    %697 = vadd.xlane.f32.xlu0 %v634
    %v698 = vpop.xlane.xlu0 %697
    %699 = vadd.xlane.f32.xlu0 %v636
    %v700 = vpop.xlane.xlu0 %699
    %701 = vadd.xlane.f32.xlu0 %v638
    %v702 = vpop.xlane.xlu0 %701
    %703 = vadd.xlane.f32.xlu0 %v640
    %v704 = vpop.xlane.xlu0 %703
    %705 = vadd.xlane.f32.xlu0 %v642
    %v706 = vpop.xlane.xlu0 %705
    %707 = vadd.xlane.f32.xlu0 %v644
    %v708 = vpop.xlane.xlu0 %707
    %709 = vadd.xlane.f32.xlu0 %v646
    %v710 = vpop.xlane.xlu0 %709
    %711 = vadd.xlane.f32.xlu0 %v648
    %v712 = vpop.xlane.xlu0 %711
    %713 = vadd.xlane.f32.xlu0 %v650
    %v714 = vpop.xlane.xlu0 %713
    %715 = vadd.xlane.f32.xlu0 %v652
    %v716 = vpop.xlane.xlu0 %715
    %717 = vadd.xlane.f32.xlu0 %v654
    %v718 = vpop.xlane.xlu0 %717
    %719 = vadd.xlane.f32.xlu0 %v656
    %v720 = vpop.xlane.xlu0 %719
    %721 = vadd.xlane.f32.xlu0 %v658
    %v722 = vpop.xlane.xlu0 %721
    %723 = vadd.xlane.f32.xlu0 %v660
    %v724 = vpop.xlane.xlu0 %723
    %v725 = vlog2.pop %v662
    %v726 = vmul.f32 %v725, 0.6931472
    %v727 = vlog2.pop %v664
    %v728 = vmul.f32 %v727, 0.6931472
    %v729 = vlog2.pop %v666
    %v730 = vmul.f32 %v729, 0.6931472
    %v731 = vlog2.pop %v668
    %v732 = vmul.f32 %v731, 0.6931472
    %v733 = vlog2.pop %v670
    %v734 = vmul.f32 %v733, 0.6931472
    %v735 = vlog2.pop %v672
    %v736 = vmul.f32 %v735, 0.6931472
    %v737 = vlog2.pop %v674
    %v738 = vmul.f32 %v737, 0.6931472
    %v739 = vlog2.pop %v676
    %v740 = vmul.f32 %v739, 0.6931472
    %v741 = vlog2.pop %v678
    %v742 = vmul.f32 %v741, 0.6931472
    %v743 = vlog2.pop %v680
    %v744 = vmul.f32 %v743, 0.6931472
    %v745 = vlog2.pop %v682
    %v746 = vmul.f32 %v745, 0.6931472
    %v747 = vlog2.pop %v684
    %v748 = vmul.f32 %v747, 0.6931472
    %v749 = vlog2.pop %v686
    %v750 = vmul.f32 %v749, 0.6931472
    %v751 = vlog2.pop %v688
    %v752 = vmul.f32 %v751, 0.6931472
    %v753 = vlog2.pop %v690
    %v754 = vmul.f32 %v753, 0.6931472
    %v755 = vlog2.pop %v692
    %v756 = vmul.f32 %v755, 0.6931472
    %v757 = vlog2.pop %v694
    %v758 = vmul.f32 %v757, 0.6931472
    %v759 = vlog2.pop %v696
    %v760 = vmul.f32 %v759, 0.6931472
    %v761 = vlog2.pop %v698
    %v762 = vmul.f32 %v761, 0.6931472
    %v763 = vlog2.pop %v700
    %v764 = vmul.f32 %v763, 0.6931472
    %v765 = vlog2.pop %v702
    %v766 = vmul.f32 %v765, 0.6931472
    %v767 = vlog2.pop %v704
    %v768 = vmul.f32 %v767, 0.6931472
    %v769 = vlog2.pop %v706
    %v770 = vmul.f32 %v769, 0.6931472
    %v771 = vlog2.pop %v708
    %v772 = vmul.f32 %v771, 0.6931472
    %v773 = vlog2.pop %v710
    %v774 = vmul.f32 %v773, 0.6931472
    %v775 = vlog2.pop %v712
    %v776 = vmul.f32 %v775, 0.6931472
    %v777 = vlog2.pop %v714
    %v778 = vmul.f32 %v777, 0.6931472
    %v779 = vlog2.pop %v716
    %v780 = vmul.f32 %v779, 0.6931472
    %v781 = vlog2.pop %v718
    %v782 = vmul.f32 %v781, 0.6931472
    %v783 = vlog2.pop %v720
    %v784 = vmul.f32 %v783, 0.6931472
    %v785 = vlog2.pop %v722
    %v786 = vmul.f32 %v785, 0.6931472
    %v787 = vlog2.pop %v724
    %v788 = vmul.f32 %v787, 0.6931472
    %v789 = vlaneseq
    %v790 = vand.u32 %v789, 127
    %v791 = vld [vmem:[%s5] sm:$0xff]
    %v792 = vld [vmem:[%s5 + $0x8] sm:$0xff]
    %v793 = vld [vmem:[%s5 + $0x10] sm:$0xff]
    %v794 = vld [vmem:[%s5 + $0x18] sm:$0xff]
    %v795 = vld [vmem:[%s5 + $0x20] sm:$0xff]
    %v796 = vld [vmem:[%s5 + $0x28] sm:$0xff]
    %v797 = vld [vmem:[%s5 + $0x30] sm:$0xff]
    %v798 = vld [vmem:[%s5 + $0x38] sm:$0xff]
    %v799 = vld [vmem:[%s5 + $0x40] sm:$0xff]
    %v800 = vld [vmem:[%s5 + $0x48] sm:$0xff]
    %v801 = vld [vmem:[%s5 + $0x50] sm:$0xff]
    %v802 = vld [vmem:[%s5 + $0x58] sm:$0xff]
    %v803 = vld [vmem:[%s5 + $0x60] sm:$0xff]
    %v804 = vld [vmem:[%s5 + $0x68] sm:$0xff]
    %v805 = vld [vmem:[%s5 + $0x70] sm:$0xff]
    %v806 = vld [vmem:[%s5 + $0x78] sm:$0xff]
    %v807 = vld [vmem:[%s5 + $0x80] sm:$0xff]
    %v808 = vld [vmem:[%s5 + $0x88] sm:$0xff]
    %v809 = vld [vmem:[%s5 + $0x90] sm:$0xff]
    %v810 = vld [vmem:[%s5 + $0x98] sm:$0xff]
    %v811 = vld [vmem:[%s5 + $0xa0] sm:$0xff]
    %v812 = vld [vmem:[%s5 + $0xa8] sm:$0xff]
    %v813 = vld [vmem:[%s5 + $0xb0] sm:$0xff]
    %v814 = vld [vmem:[%s5 + $0xb8] sm:$0xff]
    %v815 = vld [vmem:[%s5 + $0xc0] sm:$0xff]
    %v816 = vld [vmem:[%s5 + $0xc8] sm:$0xff]
    %v817 = vld [vmem:[%s5 + $0xd0] sm:$0xff]
    %v818 = vld [vmem:[%s5 + $0xd8] sm:$0xff]
    %v819 = vld [vmem:[%s5 + $0xe0] sm:$0xff]
    %v820 = vld [vmem:[%s5 + $0xe8] sm:$0xff]
    %v821 = vld [vmem:[%s5 + $0xf0] sm:$0xff]
    %v822 = vld [vmem:[%s5 + $0xf8] sm:$0xff]
    %823 = vset.pattern.permute.xlu0 0
    %824 = vperm.xlu0 %823, %v791
    %v825 = vpop.permute.xlu0 %824
    %826 = vset.pattern.permute.xlu0 0
    %827 = vperm.xlu0 %826, %v792
    %v828 = vpop.permute.xlu0 %827
    %829 = vset.pattern.permute.xlu0 0
    %830 = vperm.xlu0 %829, %v793
    %v831 = vpop.permute.xlu0 %830
    %832 = vset.pattern.permute.xlu0 0
    %833 = vperm.xlu0 %832, %v794
    %v834 = vpop.permute.xlu0 %833
    %835 = vset.pattern.permute.xlu0 0
    %836 = vperm.xlu0 %835, %v795
    %v837 = vpop.permute.xlu0 %836
    %838 = vset.pattern.permute.xlu0 0
    %839 = vperm.xlu0 %838, %v796
    %v840 = vpop.permute.xlu0 %839
    %841 = vset.pattern.permute.xlu0 0
    %842 = vperm.xlu0 %841, %v797
    %v843 = vpop.permute.xlu0 %842
    %844 = vset.pattern.permute.xlu0 0
    %845 = vperm.xlu0 %844, %v798
    %v846 = vpop.permute.xlu0 %845
    %847 = vset.pattern.permute.xlu0 0
    %848 = vperm.xlu0 %847, %v799
    %v849 = vpop.permute.xlu0 %848
    %850 = vset.pattern.permute.xlu0 0
    %851 = vperm.xlu0 %850, %v800
    %v852 = vpop.permute.xlu0 %851
    %853 = vset.pattern.permute.xlu0 0
    %854 = vperm.xlu0 %853, %v801
    %v855 = vpop.permute.xlu0 %854
    %856 = vset.pattern.permute.xlu0 0
    %857 = vperm.xlu0 %856, %v802
    %v858 = vpop.permute.xlu0 %857
    %859 = vset.pattern.permute.xlu0 0
    %860 = vperm.xlu0 %859, %v803
    %v861 = vpop.permute.xlu0 %860
    %862 = vset.pattern.permute.xlu0 0
    %863 = vperm.xlu0 %862, %v804
    %v864 = vpop.permute.xlu0 %863
    %865 = vset.pattern.permute.xlu0 0
    %866 = vperm.xlu0 %865, %v805
    %v867 = vpop.permute.xlu0 %866
    %868 = vset.pattern.permute.xlu0 0
    %869 = vperm.xlu0 %868, %v806
    %v870 = vpop.permute.xlu0 %869
    %871 = vset.pattern.permute.xlu0 0
    %872 = vperm.xlu0 %871, %v807
    %v873 = vpop.permute.xlu0 %872
    %874 = vset.pattern.permute.xlu0 0
    %875 = vperm.xlu0 %874, %v808
    %v876 = vpop.permute.xlu0 %875
    %877 = vset.pattern.permute.xlu0 0
    %878 = vperm.xlu0 %877, %v809
    %v879 = vpop.permute.xlu0 %878
    %880 = vset.pattern.permute.xlu0 0
    %881 = vperm.xlu0 %880, %v810
    %v882 = vpop.permute.xlu0 %881
    %883 = vset.pattern.permute.xlu0 0
    %884 = vperm.xlu0 %883, %v811
    %v885 = vpop.permute.xlu0 %884
    %886 = vset.pattern.permute.xlu0 0
    %887 = vperm.xlu0 %886, %v812
    %v888 = vpop.permute.xlu0 %887
    %889 = vset.pattern.permute.xlu0 0
    %890 = vperm.xlu0 %889, %v813
    %v891 = vpop.permute.xlu0 %890
    %892 = vset.pattern.permute.xlu0 0
    %893 = vperm.xlu0 %892, %v814
    %v894 = vpop.permute.xlu0 %893
    %895 = vset.pattern.permute.xlu0 0
    %896 = vperm.xlu0 %895, %v815
    %v897 = vpop.permute.xlu0 %896
    %898 = vset.pattern.permute.xlu0 0
    %899 = vperm.xlu0 %898, %v816
    %v900 = vpop.permute.xlu0 %899
    %901 = vset.pattern.permute.xlu0 0
    %902 = vperm.xlu0 %901, %v817
    %v903 = vpop.permute.xlu0 %902
    %904 = vset.pattern.permute.xlu0 0
    %905 = vperm.xlu0 %904, %v818
    %v906 = vpop.permute.xlu0 %905
    %907 = vset.pattern.permute.xlu0 0
    %908 = vperm.xlu0 %907, %v819
    %v909 = vpop.permute.xlu0 %908
    %910 = vset.pattern.permute.xlu0 0
    %911 = vperm.xlu0 %910, %v820
    %v912 = vpop.permute.xlu0 %911
    %913 = vset.pattern.permute.xlu0 0
    %914 = vperm.xlu0 %913, %v821
    %v915 = vpop.permute.xlu0 %914
    %916 = vset.pattern.permute.xlu0 0
    %917 = vperm.xlu0 %916, %v822
    %v918 = vpop.permute.xlu0 %917
    %vm919 = vcmp.eq.s32.totalorder %v790, %v825
    %vm920 = vcmp.eq.s32.totalorder %v790, %v828
    %vm921 = vcmp.eq.s32.totalorder %v790, %v831
    %vm922 = vcmp.eq.s32.totalorder %v790, %v834
    %vm923 = vcmp.eq.s32.totalorder %v790, %v837
    %vm924 = vcmp.eq.s32.totalorder %v790, %v840
    %vm925 = vcmp.eq.s32.totalorder %v790, %v843
    %vm926 = vcmp.eq.s32.totalorder %v790, %v846
    %vm927 = vcmp.eq.s32.totalorder %v790, %v849
    %vm928 = vcmp.eq.s32.totalorder %v790, %v852
    %vm929 = vcmp.eq.s32.totalorder %v790, %v855
    %vm930 = vcmp.eq.s32.totalorder %v790, %v858
    %vm931 = vcmp.eq.s32.totalorder %v790, %v861
    %vm932 = vcmp.eq.s32.totalorder %v790, %v864
    %vm933 = vcmp.eq.s32.totalorder %v790, %v867
    %vm934 = vcmp.eq.s32.totalorder %v790, %v870
    %vm935 = vcmp.eq.s32.totalorder %v790, %v873
    %vm936 = vcmp.eq.s32.totalorder %v790, %v876
    %vm937 = vcmp.eq.s32.totalorder %v790, %v879
    %vm938 = vcmp.eq.s32.totalorder %v790, %v882
    %vm939 = vcmp.eq.s32.totalorder %v790, %v885
    %vm940 = vcmp.eq.s32.totalorder %v790, %v888
    %vm941 = vcmp.eq.s32.totalorder %v790, %v891
    %vm942 = vcmp.eq.s32.totalorder %v790, %v894
    %vm943 = vcmp.eq.s32.totalorder %v790, %v897
    %vm944 = vcmp.eq.s32.totalorder %v790, %v900
    %vm945 = vcmp.eq.s32.totalorder %v790, %v903
    %vm946 = vcmp.eq.s32.totalorder %v790, %v906
    %vm947 = vcmp.eq.s32.totalorder %v790, %v909
    %vm948 = vcmp.eq.s32.totalorder %v790, %v912
    %vm949 = vcmp.eq.s32.totalorder %v790, %v915
    %vm950 = vcmp.eq.s32.totalorder %v790, %v918
    %v951 = vsel %vm919, 1, 0
    %v952 = vsel %vm920, 1, 0
    %v953 = vsel %vm921, 1, 0
    %v954 = vsel %vm922, 1, 0
    %v955 = vsel %vm923, 1, 0
    %v956 = vsel %vm924, 1, 0
    %v957 = vsel %vm925, 1, 0
    %v958 = vsel %vm926, 1, 0
    %v959 = vsel %vm927, 1, 0
    %v960 = vsel %vm928, 1, 0
    %v961 = vsel %vm929, 1, 0
    %v962 = vsel %vm930, 1, 0
    %v963 = vsel %vm931, 1, 0
    %v964 = vsel %vm932, 1, 0
    %v965 = vsel %vm933, 1, 0
    %v966 = vsel %vm934, 1, 0
    %v967 = vsel %vm935, 1, 0
    %v968 = vsel %vm936, 1, 0
    %v969 = vsel %vm937, 1, 0
    %v970 = vsel %vm938, 1, 0
    %v971 = vsel %vm939, 1, 0
    %v972 = vsel %vm940, 1, 0
    %v973 = vsel %vm941, 1, 0
    %v974 = vsel %vm942, 1, 0
    %v975 = vsel %vm943, 1, 0
    %v976 = vsel %vm944, 1, 0
    %v977 = vsel %vm945, 1, 0
    %v978 = vsel %vm946, 1, 0
    %v979 = vsel %vm947, 1, 0
    %v980 = vsel %vm948, 1, 0
    %v981 = vsel %vm949, 1, 0
    %v982 = vsel %vm950, 1, 0
    %v983 = vcvt.s32.f32 %v951
    %v984 = vcvt.s32.f32 %v952
    %v985 = vcvt.s32.f32 %v953
    %v986 = vcvt.s32.f32 %v954
    %v987 = vcvt.s32.f32 %v955
    %v988 = vcvt.s32.f32 %v956
    %v989 = vcvt.s32.f32 %v957
    %v990 = vcvt.s32.f32 %v958
    %v991 = vcvt.s32.f32 %v959
    %v992 = vcvt.s32.f32 %v960
    %v993 = vcvt.s32.f32 %v961
    %v994 = vcvt.s32.f32 %v962
    %v995 = vcvt.s32.f32 %v963
    %v996 = vcvt.s32.f32 %v964
    %v997 = vcvt.s32.f32 %v965
    %v998 = vcvt.s32.f32 %v966
    %v999 = vcvt.s32.f32 %v967
    %v1000 = vcvt.s32.f32 %v968
    %v1001 = vcvt.s32.f32 %v969
    %v1002 = vcvt.s32.f32 %v970
    %v1003 = vcvt.s32.f32 %v971
    %v1004 = vcvt.s32.f32 %v972
    %v1005 = vcvt.s32.f32 %v973
    %v1006 = vcvt.s32.f32 %v974
    %v1007 = vcvt.s32.f32 %v975
    %v1008 = vcvt.s32.f32 %v976
    %v1009 = vcvt.s32.f32 %v977
    %v1010 = vcvt.s32.f32 %v978
    %v1011 = vcvt.s32.f32 %v979
    %v1012 = vcvt.s32.f32 %v980
    %v1013 = vcvt.s32.f32 %v981
    %v1014 = vcvt.s32.f32 %v982
    %v1015 = vmul.f32 %v565, %v983
    %v1016 = vmul.f32 %v566, %v984
    %v1017 = vmul.f32 %v567, %v985
    %v1018 = vmul.f32 %v568, %v986
    %v1019 = vmul.f32 %v569, %v987
    %v1020 = vmul.f32 %v570, %v988
    %v1021 = vmul.f32 %v571, %v989
    %v1022 = vmul.f32 %v572, %v990
    %v1023 = vmul.f32 %v573, %v991
    %v1024 = vmul.f32 %v574, %v992
    %v1025 = vmul.f32 %v575, %v993
    %v1026 = vmul.f32 %v576, %v994
    %v1027 = vmul.f32 %v577, %v995
    %v1028 = vmul.f32 %v578, %v996
    %v1029 = vmul.f32 %v579, %v997
    %v1030 = vmul.f32 %v580, %v998
    %v1031 = vmul.f32 %v581, %v999
    %v1032 = vmul.f32 %v582, %v1000
    %v1033 = vmul.f32 %v583, %v1001
    %v1034 = vmul.f32 %v584, %v1002
    %v1035 = vmul.f32 %v585, %v1003
    %v1036 = vmul.f32 %v586, %v1004
    %v1037 = vmul.f32 %v587, %v1005
    %v1038 = vmul.f32 %v588, %v1006
    %v1039 = vmul.f32 %v589, %v1007
    %v1040 = vmul.f32 %v590, %v1008
    %v1041 = vmul.f32 %v591, %v1009
    %v1042 = vmul.f32 %v592, %v1010
    %v1043 = vmul.f32 %v593, %v1011
    %v1044 = vmul.f32 %v594, %v1012
    %v1045 = vmul.f32 %v595, %v1013
    %v1046 = vmul.f32 %v596, %v1014
    %1047 = vadd.xlane.f32.xlu0 %v1015
    %v1048 = vpop.xlane.xlu0 %1047
    %1049 = vadd.xlane.f32.xlu0 %v1016
    %v1050 = vpop.xlane.xlu0 %1049
    %1051 = vadd.xlane.f32.xlu0 %v1017
    %v1052 = vpop.xlane.xlu0 %1051
    %1053 = vadd.xlane.f32.xlu0 %v1018
    %v1054 = vpop.xlane.xlu0 %1053
    %1055 = vadd.xlane.f32.xlu0 %v1019
    %v1056 = vpop.xlane.xlu0 %1055
    %1057 = vadd.xlane.f32.xlu0 %v1020
    %v1058 = vpop.xlane.xlu0 %1057
    %1059 = vadd.xlane.f32.xlu0 %v1021
    %v1060 = vpop.xlane.xlu0 %1059
    %1061 = vadd.xlane.f32.xlu0 %v1022
    %v1062 = vpop.xlane.xlu0 %1061
    %1063 = vadd.xlane.f32.xlu0 %v1023
    %v1064 = vpop.xlane.xlu0 %1063
    %1065 = vadd.xlane.f32.xlu0 %v1024
    %v1066 = vpop.xlane.xlu0 %1065
    %1067 = vadd.xlane.f32.xlu0 %v1025
    %v1068 = vpop.xlane.xlu0 %1067
    %1069 = vadd.xlane.f32.xlu0 %v1026
    %v1070 = vpop.xlane.xlu0 %1069
    %1071 = vadd.xlane.f32.xlu0 %v1027
    %v1072 = vpop.xlane.xlu0 %1071
    %1073 = vadd.xlane.f32.xlu0 %v1028
    %v1074 = vpop.xlane.xlu0 %1073
    %1075 = vadd.xlane.f32.xlu0 %v1029
    %v1076 = vpop.xlane.xlu0 %1075
    %1077 = vadd.xlane.f32.xlu0 %v1030
    %v1078 = vpop.xlane.xlu0 %1077
    %1079 = vadd.xlane.f32.xlu0 %v1031
    %v1080 = vpop.xlane.xlu0 %1079
    %1081 = vadd.xlane.f32.xlu0 %v1032
    %v1082 = vpop.xlane.xlu0 %1081
    %1083 = vadd.xlane.f32.xlu0 %v1033
    %v1084 = vpop.xlane.xlu0 %1083
    %1085 = vadd.xlane.f32.xlu0 %v1034
    %v1086 = vpop.xlane.xlu0 %1085
    %1087 = vadd.xlane.f32.xlu0 %v1035
    %v1088 = vpop.xlane.xlu0 %1087
    %1089 = vadd.xlane.f32.xlu0 %v1036
    %v1090 = vpop.xlane.xlu0 %1089
    %1091 = vadd.xlane.f32.xlu0 %v1037
    %v1092 = vpop.xlane.xlu0 %1091
    %1093 = vadd.xlane.f32.xlu0 %v1038
    %v1094 = vpop.xlane.xlu0 %1093
    %1095 = vadd.xlane.f32.xlu0 %v1039
    %v1096 = vpop.xlane.xlu0 %1095
    %1097 = vadd.xlane.f32.xlu0 %v1040
    %v1098 = vpop.xlane.xlu0 %1097
    %1099 = vadd.xlane.f32.xlu0 %v1041
    %v1100 = vpop.xlane.xlu0 %1099
    %1101 = vadd.xlane.f32.xlu0 %v1042
    %v1102 = vpop.xlane.xlu0 %1101
    %1103 = vadd.xlane.f32.xlu0 %v1043
    %v1104 = vpop.xlane.xlu0 %1103
    %1105 = vadd.xlane.f32.xlu0 %v1044
    %v1106 = vpop.xlane.xlu0 %1105
    %1107 = vadd.xlane.f32.xlu0 %v1045
    %v1108 = vpop.xlane.xlu0 %1107
    %1109 = vadd.xlane.f32.xlu0 %v1046
    %v1110 = vpop.xlane.xlu0 %1109
    %v1111 = vsub.f32 %v726, %v1048
    %v1112 = vsub.f32 %v728, %v1050
    %v1113 = vsub.f32 %v730, %v1052
    %v1114 = vsub.f32 %v732, %v1054
    %v1115 = vsub.f32 %v734, %v1056
    %v1116 = vsub.f32 %v736, %v1058
    %v1117 = vsub.f32 %v738, %v1060
    %v1118 = vsub.f32 %v740, %v1062
    %v1119 = vsub.f32 %v742, %v1064
    %v1120 = vsub.f32 %v744, %v1066
    %v1121 = vsub.f32 %v746, %v1068
    %v1122 = vsub.f32 %v748, %v1070
    %v1123 = vsub.f32 %v750, %v1072
    %v1124 = vsub.f32 %v752, %v1074
    %v1125 = vsub.f32 %v754, %v1076
    %v1126 = vsub.f32 %v756, %v1078
    %v1127 = vsub.f32 %v758, %v1080
    %v1128 = vsub.f32 %v760, %v1082
    %v1129 = vsub.f32 %v762, %v1084
    %v1130 = vsub.f32 %v764, %v1086
    %v1131 = vsub.f32 %v766, %v1088
    %v1132 = vsub.f32 %v768, %v1090
    %v1133 = vsub.f32 %v770, %v1092
    %v1134 = vsub.f32 %v772, %v1094
    %v1135 = vsub.f32 %v774, %v1096
    %v1136 = vsub.f32 %v776, %v1098
    %v1137 = vsub.f32 %v778, %v1100
    %v1138 = vsub.f32 %v780, %v1102
    %v1139 = vsub.f32 %v782, %v1104
    %v1140 = vsub.f32 %v784, %v1106
    %v1141 = vsub.f32 %v786, %v1108
    %v1142 = vsub.f32 %v788, %v1110
    %vm1143 = vcmask 7168
    %v1144 = vsel %vm1143, %v1111, 0.0
    %v1145 = vsel %vm1143, %v1112, 0.0
    %v1146 = vadd.f32 %v1144, %v1145
    %v1147 = vsel %vm1143, %v1113, 0.0
    %v1148 = vadd.f32 %v1146, %v1147
    %v1149 = vsel %vm1143, %v1114, 0.0
    %v1150 = vadd.f32 %v1148, %v1149
    %v1151 = vsel %vm1143, %v1115, 0.0
    %v1152 = vadd.f32 %v1150, %v1151
    %v1153 = vsel %vm1143, %v1116, 0.0
    %v1154 = vadd.f32 %v1152, %v1153
    %v1155 = vsel %vm1143, %v1117, 0.0
    %v1156 = vadd.f32 %v1154, %v1155
    %v1157 = vsel %vm1143, %v1118, 0.0
    %v1158 = vadd.f32 %v1156, %v1157
    %v1159 = vsel %vm1143, %v1119, 0.0
    %v1160 = vadd.f32 %v1158, %v1159
    %v1161 = vsel %vm1143, %v1120, 0.0
    %v1162 = vadd.f32 %v1160, %v1161
    %v1163 = vsel %vm1143, %v1121, 0.0
    %v1164 = vadd.f32 %v1162, %v1163
    %v1165 = vsel %vm1143, %v1122, 0.0
    %v1166 = vadd.f32 %v1164, %v1165
    %v1167 = vsel %vm1143, %v1123, 0.0
    %v1168 = vadd.f32 %v1166, %v1167
    %v1169 = vsel %vm1143, %v1124, 0.0
    %v1170 = vadd.f32 %v1168, %v1169
    %v1171 = vsel %vm1143, %v1125, 0.0
    %v1172 = vadd.f32 %v1170, %v1171
    %v1173 = vsel %vm1143, %v1126, 0.0
    %v1174 = vadd.f32 %v1172, %v1173
    %v1175 = vsel %vm1143, %v1127, 0.0
    %v1176 = vadd.f32 %v1174, %v1175
    %v1177 = vsel %vm1143, %v1128, 0.0
    %v1178 = vadd.f32 %v1176, %v1177
    %v1179 = vsel %vm1143, %v1129, 0.0
    %v1180 = vadd.f32 %v1178, %v1179
    %v1181 = vsel %vm1143, %v1130, 0.0
    %v1182 = vadd.f32 %v1180, %v1181
    %v1183 = vsel %vm1143, %v1131, 0.0
    %v1184 = vadd.f32 %v1182, %v1183
    %v1185 = vsel %vm1143, %v1132, 0.0
    %v1186 = vadd.f32 %v1184, %v1185
    %v1187 = vsel %vm1143, %v1133, 0.0
    %v1188 = vadd.f32 %v1186, %v1187
    %v1189 = vsel %vm1143, %v1134, 0.0
    %v1190 = vadd.f32 %v1188, %v1189
    %v1191 = vsel %vm1143, %v1135, 0.0
    %v1192 = vadd.f32 %v1190, %v1191
    %v1193 = vsel %vm1143, %v1136, 0.0
    %v1194 = vadd.f32 %v1192, %v1193
    %v1195 = vsel %vm1143, %v1137, 0.0
    %v1196 = vadd.f32 %v1194, %v1195
    %v1197 = vsel %vm1143, %v1138, 0.0
    %v1198 = vadd.f32 %v1196, %v1197
    %v1199 = vsel %vm1143, %v1139, 0.0
    %v1200 = vadd.f32 %v1198, %v1199
    %v1201 = vsel %vm1143, %v1140, 0.0
    %v1202 = vadd.f32 %v1200, %v1201
    %v1203 = vsel %vm1143, %v1141, 0.0
    %v1204 = vadd.f32 %v1202, %v1203
    %v1205 = vsel %vm1143, %v1142, 0.0
    %v1206 = vadd.f32 %v1204, %v1205
    %1207 = vadd.xlane.f32.xlu0 %v1206
    %v1208 = vpop.xlane.xlu0 %1207
    %v1209 = vrot.slane %v1208, 4
    %v1210 = vadd.f32 %v1208, %v1209
    %v1211 = vrot.slane %v1210, 2
    %v1212 = vadd.f32 %v1210, %v1211
    %v1213 = vrot.slane %v1212, 1
    %v1214 = vadd.f32 %v1212, %v1213
    %s1215 = vtos %v1214
    %v1216 = vstv %s1215
    %1217 = vst [vmem:[#allocation8] sm:$0xff] %v1216
    // Predicated region
    $region34: #{tpu_custom_call.1} parent=1 // pred_check
      _
    $region35: #{tpu_custom_call.1} parent=1 // pred_check_branch
      %1219 = sbr.rel (0) target = $region37
    $region36: #{tpu_custom_call.1} parent=1 // pred_region
      %1221 = vsyncadd [#allocation4], 0
      %s1222 = sshll.u32 [#allocation7], 4
      %s1223 = int_to_ptr.vmem [resolvable:$true] %s1222
      %s1224 = sshll.u32 %s6, 4
      %s1225 = int_to_ptr.hbm [resolvable:$true] %s1224
      %1230 = dma.vmem_to_hbm [thread:$0]  %s1223, 4096, %s1225, [#allocation4], 128, 128, 8
    $region37: #{tpu_custom_call.1} parent=1 // pred_fallthru
      _
    // Predicated region
    $region38: #{tpu_custom_call.1} parent=1 // pred_check
      _
    $region39: #{tpu_custom_call.1} parent=1 // pred_check_branch
      %1232 = sbr.rel (0) target = $region41
    $region40: #{tpu_custom_call.1} parent=1 // pred_region
      %1234 = vsyncadd [#allocation9], 0
      %s1236 = sshll.u32 [#allocation8], 4
      %s1237 = int_to_ptr.vmem [resolvable:$true] %s1236
      %s1238 = sshll.u32 %s7, 4
      %s1239 = int_to_ptr.hbm [resolvable:$true] %s1238
      %1241 = dma.vmem_to_hbm [thread:$0]  %s1237, 128, %s1239, [#allocation9]
    $region41: #{tpu_custom_call.1} parent=1 // pred_fallthru
      _
    // Predicated region
    $region42: #{tpu_custom_call.1} parent=1 // pred_check
      _
    $region43: #{tpu_custom_call.1} parent=1 // pred_check_branch
      %1243 = sbr.rel (0) target = $region45
    $region44: #{tpu_custom_call.1} parent=1 // pred_region
      %1245 = dma.done [#allocation4], 4096
    $region45: #{tpu_custom_call.1} parent=1 // pred_fallthru
      _
    // Predicated region
    $region46: #{tpu_custom_call.1} parent=1 // pred_check
      _
    $region47: #{tpu_custom_call.1} parent=1 // pred_check_branch
      %1247 = sbr.rel (0) target = $region49
    $region48: #{tpu_custom_call.1} parent=1 // pred_region
      %1249 = dma.done [#allocation9], 128
    $region49: #{tpu_custom_call.1} parent=1 // pred_fallthru
      _
    %1250 = vsyncpa [#allocation3], 1
    %1251 = vsyncpa [#allocation6], 1
    %1252 = vsyncpa [#allocation4], 1
    %1253 = vsyncpa [#allocation9], 1

</llo_original>
